<compile_context>
chip_gen: v7x
topology: tpu7x:2x2x1
jax: 0.10.0
libtpu: 0.0.40
codegen_flags: <defaults>
</compile_context>

<pallas_src>
import math
import functools

import jax
import jax.numpy as jnp
from jax.experimental import pallas as pl
from jax.experimental.pallas import tpu as pltpu

_MIB = 1024 * 1024


def _round_up(x, m):
    return ((x + m - 1) // m) * m


def _tpu_params():
    """Per-generation tiling knobs (lane alignment, TC count, VMEM budgets)."""
    kind = ""
    try:
        kind = jax.devices()[0].device_kind.lower()
    except Exception:
        pass
    if "v7" in kind:        # 2x256x256 MXU, 2 TC/chip, 64 MiB VMEM per TC
        return dict(align=256, n_tc=2, max_tm=512,
                    tile_budget=20 * _MIB, vmem_cap=32 * _MIB)
    if "v6" in kind:        # 2x256x256 MXU, 1 TC, 128 MiB VMEM
        return dict(align=256, n_tc=1, max_tm=1024,
                    tile_budget=40 * _MIB, vmem_cap=80 * _MIB)
    # v5e / older / unknown: 128x128 MXU granularity, 1 TC, 128 MiB VMEM
    return dict(align=128, n_tc=1, max_tm=2048,
                tile_budget=48 * _MIB, vmem_cap=96 * _MIB)


def _largest_dividing_tile(dim_pad, max_tile, unit):
    """Largest multiple of `unit` that divides dim_pad and is <= max_tile."""
    n_units = dim_pad // unit
    best = unit
    for d in range(1, n_units + 1):
        t = d * unit
        if t <= max_tile and n_units % d == 0:
            best = t
    return best


def _footprint(tm, kblk, tn, out_bytes, with_acc):
    """Approximate double-buffered VMEM bytes for one grid step."""
    return (2 * tm * kblk * 2          # activation tile (bf16, 2 buffers)
            + 2 * kblk * tn * 2        # weight tile (bf16, 2 buffers)
            + 2 * tn * 4               # bias row
            + 2 * tm * tn * out_bytes  # output tile (2 buffers)
            + (tm * tn * 4 if with_acc else 0))


def _choose_tm(M_pad, kblk, tn, out_bytes, with_acc, budget, max_tm, min_i_blocks):
    """Largest 128-multiple tile dividing M_pad that fits the VMEM budget and
    leaves at least `min_i_blocks` blocks along the M axis."""
    n_units = M_pad // 128
    cands = sorted({d * 128 for d in range(1, n_units + 1) if n_units % d == 0},
                   reverse=True)
    for tm in cands:
        if tm > max_tm:
            continue
        if M_pad // tm < min_i_blocks:
            continue
        if _footprint(tm, kblk, tn, out_bytes, with_acc) <= budget:
            return tm
    return 128


# --------------------------------------------------------------------------
# Pallas kernels
# --------------------------------------------------------------------------
def _gemm_bias_fullk_kernel(x_ref, w_ref, b_ref, o_ref):
    """Full-K contraction in one shot: out = x @ w + b (f32 accumulate)."""
    acc = jnp.dot(x_ref[...], w_ref[...], preferred_element_type=jnp.float32)
    o_ref[...] = (acc + b_ref[...]).astype(o_ref.dtype)


def _gemm_bias_acc_kernel(x_ref, w_ref, b_ref, o_ref, acc_ref):
    """Large-K fallback: accumulate over the K grid axis in an f32 scratch."""
    k = pl.program_id(2)

    @pl.when(k == 0)
    def _():
        acc_ref[...] = jnp.zeros_like(acc_ref)

    acc_ref[...] += jnp.dot(x_ref[...], w_ref[...],
                            preferred_element_type=jnp.float32)

    @pl.when(k == pl.num_programs(2) - 1)
    def _():
        o_ref[...] = (acc_ref[...] + b_ref[...]).astype(o_ref.dtype)


def _gemm_bias(patches, weight_t, bias_row, *, tm, tn, tk, full_k,
               out_dtype, vmem_limit):
    """patches: (M_pad, K_pad) bf16, weight_t: (K_pad, Cout_pad) bf16,
    bias_row: (1, Cout_pad) f32.  All dims multiples of their tiles."""
    M_pad, K_pad = patches.shape
    Cout_pad = weight_t.shape[1]
    grid_i = M_pad // tm
    grid_j = Cout_pad // tn

    if full_k:
        if grid_j == 1:
            # i outermost (many blocks -> megacore can split it); weight/bias
            # block index never changes -> fetched once, resident in VMEM.
            grid = (grid_i, grid_j)
            act_map = lambda i, j: (i, 0)
            w_map = lambda i, j: (0, j)
            b_map = lambda i, j: (0, j)
            out_map = lambda i, j: (i, j)
        else:
            # j outermost so the (K_pad, tn) weight tile stays resident across
            # the whole inner i sweep (fetched once per j, not per step).
            grid = (grid_j, grid_i)
            act_map = lambda j, i: (i, 0)
            w_map = lambda j, i: (0, j)
            b_map = lambda j, i: (0, j)
            out_map = lambda j, i: (i, j)
        return pl.pallas_call(
            _gemm_bias_fullk_kernel,
            out_shape=jax.ShapeDtypeStruct((M_pad, Cout_pad), out_dtype),
            grid_spec=pltpu.PrefetchScalarGridSpec(
                num_scalar_prefetch=0,
                grid=grid,
                in_specs=[
                    pl.BlockSpec((tm, K_pad), act_map),   # activations (streamed)
                    pl.BlockSpec((K_pad, tn), w_map),     # weight (VMEM-resident)
                    pl.BlockSpec((1, tn), b_map),         # bias (VMEM-resident)
                ],
                out_specs=pl.BlockSpec((tm, tn), out_map),
            ),
            compiler_params=pltpu.CompilerParams(
                dimension_semantics=("parallel", "parallel"),
                vmem_limit_bytes=vmem_limit,
            ),
        )(patches, weight_t, bias_row)

    # Large-K fallback: 3-D grid, K innermost ("arbitrary"), f32 accumulator.
    grid = (grid_i, grid_j, K_pad // tk)
    return pl.pallas_call(
        _gemm_bias_acc_kernel,
        out_shape=jax.ShapeDtypeStruct((M_pad, Cout_pad), out_dtype),
        grid_spec=pltpu.PrefetchScalarGridSpec(
            num_scalar_prefetch=0,
            grid=grid,
            in_specs=[
                pl.BlockSpec((tm, tk), lambda i, j, k: (i, k)),
                pl.BlockSpec((tk, tn), lambda i, j, k: (k, j)),
                pl.BlockSpec((1, tn), lambda i, j, k: (0, j)),
            ],
            out_specs=pl.BlockSpec((tm, tn), lambda i, j, k: (i, j)),
            scratch_shapes=[pltpu.VMEM((tm, tn), jnp.float32)],
        ),
        compiler_params=pltpu.CompilerParams(
            dimension_semantics=("parallel", "parallel", "arbitrary"),
            vmem_limit_bytes=vmem_limit,
        ),
    )(patches, weight_t, bias_row)


# --------------------------------------------------------------------------
# im2col glue (torch.nn.Unfold feature order: c, kh, kw), padded + cast in
# the same producer chain so only one HBM materialization happens.
# --------------------------------------------------------------------------
def _im2col_padded(x, kernel_size, stride, padding, m_pad, k_pad, dtype):
    N, C, H, W = x.shape
    OW = (H + 2 * padding - kernel_size) // stride + 1
    xp = jnp.pad(x.astype(dtype),
                 ((0, 0), (0, 0), (padding, padding), (padding, padding)))
    cols = [xp[:, :, kh:kh + stride * OW:stride, kw:kw + stride * OW:stride]
            for kh in range(kernel_size) for kw in range(kernel_size)]
    # (N, C, K*K, OH, OW): feature index = c*K*K + kh*K + kw after flatten.
    p = jnp.stack(cols, axis=2)
    # -> (N, OH, OW, C, K*K) -> (M, C*K*K)
    p = jnp.transpose(p, (0, 3, 4, 1, 2))
    p = p.reshape(N * OW * OW, C * kernel_size * kernel_size)
    M, Kdim = p.shape
    p = jnp.pad(p, ((0, m_pad - M), (0, k_pad - Kdim)))
    return p, OW


# --------------------------------------------------------------------------
# CustomConv2d forward
# --------------------------------------------------------------------------
def custom_conv2d_forward(x, weight, bias, *, kernel_size, stride, padding,
                          compute_dtype=jnp.bfloat16, out_dtype=jnp.bfloat16):
    if x.shape[2] != x.shape[3]:
        raise ValueError(
            f"not supported inputs width, and height ({x.shape[2]}, {x.shape[3]})")
    N, Cin, H, W = x.shape
    Cout = weight.shape[0]
    OW = (H + 2 * padding - kernel_size) // stride + 1
    M = N * OW * OW
    Kdim = Cin * kernel_size * kernel_size

    hw = _tpu_params()
    align = hw["align"]

    # Lane-aligned padded dims. K/Cout use the MXU-native width (256 on
    # v6e/v7x, 128 on v5e); M is padded only to 128 (no tm-multiple padding).
    K_pad = _round_up(Kdim, align)
    Cout_pad = _round_up(Cout, align)
    M_pad = _round_up(M, 128)

    out_bytes = jnp.dtype(out_dtype).itemsize
    tn = _largest_dividing_tile(Cout_pad, 512, align)
    grid_j = Cout_pad // tn
    # Guarantee enough parallel blocks for every TensorCore (v7x: 2 TCs).
    min_i_blocks = min(max(1, -(-hw["n_tc"] // grid_j)), M_pad // 128)

    full_k = K_pad <= 2048
    tk = K_pad if full_k else _largest_dividing_tile(K_pad, 1024, align)
    tm = _choose_tm(M_pad, tk, tn, out_bytes, not full_k,
                    hw["tile_budget"], hw["max_tm"], min_i_blocks)
    vmem_limit = int(min(
        max(_footprint(tm, tk, tn, out_bytes, not full_k) + 8 * _MIB, 16 * _MIB),
        hw["vmem_cap"]))

    patches, _ = _im2col_padded(x, kernel_size, stride, padding,
                                M_pad, K_pad, compute_dtype)   # (M_pad, K_pad) bf16

    w2d = weight.reshape(Cout, Kdim).astype(compute_dtype)      # (Cout, Kdim)
    w2d = jnp.pad(w2d, ((0, Cout_pad - Cout), (0, K_pad - Kdim)))
    weight_t = jnp.transpose(w2d, (1, 0))                       # (K_pad, Cout_pad)

    if bias is None:
        bias_row = jnp.zeros((1, Cout_pad), dtype=jnp.float32)
    else:
        bias_row = jnp.pad(bias.reshape(1, Cout).astype(jnp.float32),
                           ((0, 0), (0, Cout_pad - Cout)))

    out = _gemm_bias(patches, weight_t, bias_row, tm=tm, tn=tn, tk=tk,
                     full_k=full_k, out_dtype=out_dtype, vmem_limit=vmem_limit)

    out = out[:M, :Cout].reshape(N, OW, OW, Cout)               # NHWC
    out = jnp.transpose(out, (0, 3, 1, 2))                      # -> NCHW (module contract)
    return out


if __name__ == "__main__":
    # Small shapes consistent with the module's forward.
    batch, in_channels, out_channels = 2, 4, 8
    spatial, kernel_size, stride, padding = 16, 3, 1, 1

    key = jax.random.PRNGKey(0)
    kx, kw_, kb = jax.random.split(key, 3)

    x = jax.random.normal(kx, (batch, in_channels, spatial, spatial), dtype=jnp.float32)
    # Deterministic parameter init (the module leaves torch.empty uninitialized;
    # use kaiming-uniform-like scaling for a sane synthetic init).
    fan_in = in_channels * kernel_size * kernel_size
    bound = 1.0 / math.sqrt(fan_in)
    weight = jax.random.uniform(kw_, (out_channels, in_channels, kernel_size, kernel_size),
                                minval=-bound, maxval=bound, dtype=jnp.float32)
    bias = jax.random.uniform(kb, (out_channels,), minval=-bound, maxval=bound,
                              dtype=jnp.float32)

    fwd = jax.jit(functools.partial(custom_conv2d_forward,
                                    kernel_size=kernel_size,
                                    stride=stride,
                                    padding=padding))
    out = fwd(x, weight, bias)
    jax.block_until_ready(out)
    assert out.shape == (batch, out_channels, spatial, spatial), out.shape

    # Check against a reference with matched operand precision (bf16 operands,
    # f32 accumulation); tolerance allows for the bf16 output cast.
    ref_bf16 = jax.lax.conv_general_dilated(
        x.astype(jnp.bfloat16), weight.astype(jnp.bfloat16),
        window_strides=(stride, stride),
        padding=[(padding, padding), (padding, padding)],
        dimension_numbers=("NCHW", "OIHW", "NCHW"),
        preferred_element_type=jnp.float32) + bias.reshape(1, -1, 1, 1)
    err = float(jnp.max(jnp.abs(out.astype(jnp.float32) - ref_bf16)))
    assert jnp.allclose(out.astype(jnp.float32), ref_bf16, atol=2e-2, rtol=2e-2), err

    # Loose sanity check against the full-f32 conv (bf16 MXU operands/output).
    ref_f32 = jax.lax.conv_general_dilated(
        x, weight, window_strides=(stride, stride),
        padding=[(padding, padding), (padding, padding)],
        dimension_numbers=("NCHW", "OIHW", "NCHW")) + bias.reshape(1, -1, 1, 1)
    assert jnp.allclose(out.astype(jnp.float32), ref_f32, atol=1.5e-1, rtol=1.5e-1), \
        float(jnp.max(jnp.abs(out.astype(jnp.float32) - ref_f32)))

    print("KERNEL_OK")
</pallas_src>

<mosaic_0001>
module attributes {stable_mosaic.version = 11 : i64} {
  func.func @_gemm_bias_fullk_kernel(%arg0: i32, %arg1: i32, %arg2: memref<512x128xbf16, #tpu.memory_space<vmem>>, %arg3: memref<128x128xbf16, #tpu.memory_space<vmem>>, %arg4: memref<1x128xf32, #tpu.memory_space<vmem>>, %arg5: memref<512x128xbf16, #tpu.memory_space<vmem>>) attributes {dimension_semantics = [#tpu.dimension_semantics<parallel>, #tpu.dimension_semantics<parallel>], iteration_bounds = array<i64: 1, 1>, scalar_prefetch = 0 : i64, scratch_operands = 0 : i64, tpu.core_type = #tpu.core_type<tc>, window_params = [{transform_indices = @transform_0, window_bounds = array<i64: 512, 128>}, {transform_indices = @transform_1, window_bounds = array<i64: 128, 128>}, {transform_indices = @transform_2, window_bounds = array<i64: 1, 128>}, {transform_indices = @transform_3, window_bounds = array<i64: 512, 128>}]} {
    %c0 = arith.constant 0 : index
    %c0_0 = arith.constant 0 : index
    %0 = vector.load %arg2[%c0, %c0_0] : memref<512x128xbf16, #tpu.memory_space<vmem>>, vector<512x128xbf16>
    %c0_1 = arith.constant 0 : index
    %c0_2 = arith.constant 0 : index
    %1 = vector.load %arg3[%c0_1, %c0_2] : memref<128x128xbf16, #tpu.memory_space<vmem>>, vector<128x128xbf16>
    %cst = arith.constant dense<0.000000e+00> : vector<512x128xf32>
    %2 = tpu.matmul %0, %1, %cst {dimension_numbers = #tpu.dot_dimension_numbers<[1], [0], [0], [1], [0, 0, 1, 1], [], []>} : vector<512x128xbf16>, vector<128x128xbf16>, vector<512x128xf32> -> vector<512x128xf32>
    %c0_3 = arith.constant 0 : index
    %c0_4 = arith.constant 0 : index
    %3 = vector.load %arg4[%c0_3, %c0_4] : memref<1x128xf32, #tpu.memory_space<vmem>>, vector<1x128xf32>
    %4 = vector.broadcast %3 : vector<1x128xf32> to vector<512x128xf32>
    %5 = arith.addf %2, %4 : vector<512x128xf32>
    %6 = arith.truncf %5 : vector<512x128xf32> to vector<512x128xbf16>
    %c0_5 = arith.constant 0 : index
    %c0_6 = arith.constant 0 : index
    %7 = vector.load %arg5[%c0_5, %c0_6] : memref<512x128xbf16, #tpu.memory_space<vmem>>, vector<512x128xbf16>
    tpu.vector_store %arg5[%c0_5, %c0_6], %6 {strides = array<i32>} : memref<512x128xbf16, #tpu.memory_space<vmem>>, vector<512x128xbf16>,
    return
  }
  func.func @transform_0(%arg0: i32, %arg1: i32) -> (i32, i32) {
    %c0_i32 = arith.constant 0 : i32
    %c0_i32_0 = arith.constant 0 : i32
    return %arg0, %c0_i32 : i32, i32
  }
  func.func @transform_1(%arg0: i32, %arg1: i32) -> (i32, i32) {
    %c0_i32 = arith.constant 0 : i32
    %c0_i32_0 = arith.constant 0 : i32
    return %c0_i32, %arg1 : i32, i32
  }
  func.func @transform_2(%arg0: i32, %arg1: i32) -> (i32, i32) {
    %c0_i32 = arith.constant 0 : i32
    %c0_i32_0 = arith.constant 0 : i32
    return %c0_i32, %arg1 : i32, i32
  }
  func.func @transform_3(%arg0: i32, %arg1: i32) -> (i32, i32) {
    %c0_i32 = arith.constant 0 : i32
    return %arg0, %arg1 : i32, i32
  }
}

</mosaic_0001>

<llo_original>
// kernel: custom_conv2d_forward.1
$region0: #{custom_conv2d_forward.1}
  #allocation0 [shape = 'u32[]', space=smem, size = 0x4, offset = 0x4, fixed_abs, tag = 'smem constant byte address 0x4 - core index']
  #allocation1 [shape = 'u32[144,128]{1,0:T(1,128)}', space=vmem, size = 0x12000, scoped, tag = 'internal scratch']
  %s0 = inlined_call_operand.vmem [shape: bf16[512,128], index: 0, kind: input, shape index: {}]
  %s1 = inlined_call_operand.vmem [shape: bf16[128,128], index: 1, kind: input, shape index: {}]
  %s2 = inlined_call_operand.vmem [shape: f32[1,128], index: 2, kind: input, shape index: {}]
  %s3 = inlined_call_operand.vmem [shape: bf16[512,128], index: 3, kind: output, shape index: {}]
  %s4 = sld [smem:[#allocation0]]
  $region22: #{custom_conv2d_forward.1} parent=0
    _
  %s6 = ssub.s32 1, %s4
  %s7 = scalar_select 0, %s6, %s4
  // Predicated region
  $region2: #{custom_conv2d_forward.1} parent=0 // pred_check
    _
  $region3: #{custom_conv2d_forward.1} parent=0 // pred_check_branch
    %9 = sbr.rel (0) target = $region5
  $region4: #{custom_conv2d_forward.1} parent=0 // pred_region
    _
  $region5: #{custom_conv2d_forward.1} parent=0 // pred_fallthru
    _
  // Predicated region
  $region6: #{custom_conv2d_forward.1} parent=0 // pred_check
    _
  $region7: #{custom_conv2d_forward.1} parent=0 // pred_check_branch
    %11 = sbr.rel (0) target = $region9
  $region8: #{custom_conv2d_forward.1} parent=0 // pred_region
    _
  $region9: #{custom_conv2d_forward.1} parent=0 // pred_fallthru
    _
  // Predicated region
  $region10: #{custom_conv2d_forward.1} parent=0 // pred_check
    _
  $region11: #{custom_conv2d_forward.1} parent=0 // pred_check_branch
    %13 = sbr.rel (0) target = $region13
  $region12: #{custom_conv2d_forward.1} parent=0 // pred_region
    _
  $region13: #{custom_conv2d_forward.1} parent=0 // pred_fallthru
    _
  %v15 = vld [vmem:[%s0] sm:$0xf]
  %v16 = vld [vmem:[%s0 + $0x4] sm:$0xf]
  %v17 = vld [vmem:[%s0 + $0x8] sm:$0xf]
  %v18 = vld [vmem:[%s0 + $0xc] sm:$0xf]
  %v19 = vld [vmem:[%s0 + $0x10] sm:$0xf]
  %v20 = vld [vmem:[%s0 + $0x14] sm:$0xf]
  %v21 = vld [vmem:[%s0 + $0x18] sm:$0xf]
  %v22 = vld [vmem:[%s0 + $0x1c] sm:$0xf]
  %v23 = vld [vmem:[%s0 + $0x20] sm:$0xf]
  %v24 = vld [vmem:[%s0 + $0x24] sm:$0xf]
  %v25 = vld [vmem:[%s0 + $0x28] sm:$0xf]
  %v26 = vld [vmem:[%s0 + $0x2c] sm:$0xf]
  %v27 = vld [vmem:[%s0 + $0x30] sm:$0xf]
  %v28 = vld [vmem:[%s0 + $0x34] sm:$0xf]
  %v29 = vld [vmem:[%s0 + $0x38] sm:$0xf]
  %v30 = vld [vmem:[%s0 + $0x3c] sm:$0xf]
  %v31 = vld [vmem:[%s0 + $0x40] sm:$0xf]
  %v32 = vld [vmem:[%s0 + $0x44] sm:$0xf]
  %v33 = vld [vmem:[%s0 + $0x48] sm:$0xf]
  %v34 = vld [vmem:[%s0 + $0x4c] sm:$0xf]
  %v35 = vld [vmem:[%s0 + $0x50] sm:$0xf]
  %v36 = vld [vmem:[%s0 + $0x54] sm:$0xf]
  %v37 = vld [vmem:[%s0 + $0x58] sm:$0xf]
  %v38 = vld [vmem:[%s0 + $0x5c] sm:$0xf]
  %v39 = vld [vmem:[%s0 + $0x60] sm:$0xf]
  %v40 = vld [vmem:[%s0 + $0x64] sm:$0xf]
  %v41 = vld [vmem:[%s0 + $0x68] sm:$0xf]
  %v42 = vld [vmem:[%s0 + $0x6c] sm:$0xf]
  %v43 = vld [vmem:[%s0 + $0x70] sm:$0xf]
  %v44 = vld [vmem:[%s0 + $0x74] sm:$0xf]
  %v45 = vld [vmem:[%s0 + $0x78] sm:$0xf]
  %v46 = vld [vmem:[%s0 + $0x7c] sm:$0xf]
  %v47 = vld [vmem:[%s0 + $0x80] sm:$0xf]
  %v48 = vld [vmem:[%s0 + $0x84] sm:$0xf]
  %v49 = vld [vmem:[%s0 + $0x88] sm:$0xf]
  %v50 = vld [vmem:[%s0 + $0x8c] sm:$0xf]
  %v51 = vld [vmem:[%s0 + $0x90] sm:$0xf]
  %v52 = vld [vmem:[%s0 + $0x94] sm:$0xf]
  %v53 = vld [vmem:[%s0 + $0x98] sm:$0xf]
  %v54 = vld [vmem:[%s0 + $0x9c] sm:$0xf]
  %v55 = vld [vmem:[%s0 + $0xa0] sm:$0xf]
  %v56 = vld [vmem:[%s0 + $0xa4] sm:$0xf]
  %v57 = vld [vmem:[%s0 + $0xa8] sm:$0xf]
  %v58 = vld [vmem:[%s0 + $0xac] sm:$0xf]
  %v59 = vld [vmem:[%s0 + $0xb0] sm:$0xf]
  %v60 = vld [vmem:[%s0 + $0xb4] sm:$0xf]
  %v61 = vld [vmem:[%s0 + $0xb8] sm:$0xf]
  %v62 = vld [vmem:[%s0 + $0xbc] sm:$0xf]
  %v63 = vld [vmem:[%s0 + $0xc0] sm:$0xf]
  %v64 = vld [vmem:[%s0 + $0xc4] sm:$0xf]
  %v65 = vld [vmem:[%s0 + $0xc8] sm:$0xf]
  %v66 = vld [vmem:[%s0 + $0xcc] sm:$0xf]
  %v67 = vld [vmem:[%s0 + $0xd0] sm:$0xf]
  %v68 = vld [vmem:[%s0 + $0xd4] sm:$0xf]
  %v69 = vld [vmem:[%s0 + $0xd8] sm:$0xf]
  %v70 = vld [vmem:[%s0 + $0xdc] sm:$0xf]
  %v71 = vld [vmem:[%s0 + $0xe0] sm:$0xf]
  %v72 = vld [vmem:[%s0 + $0xe4] sm:$0xf]
  %v73 = vld [vmem:[%s0 + $0xe8] sm:$0xf]
  %v74 = vld [vmem:[%s0 + $0xec] sm:$0xf]
  %v75 = vld [vmem:[%s0 + $0xf0] sm:$0xf]
  %v76 = vld [vmem:[%s0 + $0xf4] sm:$0xf]
  %v77 = vld [vmem:[%s0 + $0xf8] sm:$0xf]
  %v78 = vld [vmem:[%s0 + $0xfc] sm:$0xf]
  %v79 = vld [vmem:[%s1] sm:$0xf]
  %v80 = vld [vmem:[%s1 + $0x4] sm:$0xf]
  %v81 = vld [vmem:[%s1 + $0x8] sm:$0xf]
  %v82 = vld [vmem:[%s1 + $0xc] sm:$0xf]
  %v83 = vld [vmem:[%s1 + $0x10] sm:$0xf]
  %v84 = vld [vmem:[%s1 + $0x14] sm:$0xf]
  %v85 = vld [vmem:[%s1 + $0x18] sm:$0xf]
  %v86 = vld [vmem:[%s1 + $0x1c] sm:$0xf]
  %v87 = vld [vmem:[%s1 + $0x20] sm:$0xf]
  %v88 = vld [vmem:[%s1 + $0x24] sm:$0xf]
  %v89 = vld [vmem:[%s1 + $0x28] sm:$0xf]
  %v90 = vld [vmem:[%s1 + $0x2c] sm:$0xf]
  %v91 = vld [vmem:[%s1 + $0x30] sm:$0xf]
  %v92 = vld [vmem:[%s1 + $0x34] sm:$0xf]
  %v93 = vld [vmem:[%s1 + $0x38] sm:$0xf]
  %v94 = vld [vmem:[%s1 + $0x3c] sm:$0xf]
  %v95 = vld [vmem:[%s2] sm:$0x1]
  %v97 = vlaneseq
  %v98 = vshrl.u32 %v97, 7
  %v99 = vsub.s32 0, %v98
  %v100 = vrot.slane %v95, %v99
  %v166 = vunpack.c.l.b16 %v15
  %v167 = vunpack.c.l.b16 %v16
  %v168 = vunpack.c.l.b16 %v17
  %v169 = vunpack.c.l.b16 %v18
  %v170 = vunpack.c.l.b16 %v19
  %v171 = vunpack.c.l.b16 %v20
  %v172 = vunpack.c.l.b16 %v21
  %v173 = vunpack.c.l.b16 %v22
  %v174 = vunpack.c.l.b16 %v23
  %v175 = vunpack.c.l.b16 %v24
  %v176 = vunpack.c.l.b16 %v25
  %v177 = vunpack.c.l.b16 %v26
  %v178 = vunpack.c.l.b16 %v27
  %v179 = vunpack.c.l.b16 %v28
  %v180 = vunpack.c.l.b16 %v29
  %v181 = vunpack.c.l.b16 %v30
  %v182 = vunpack.c.l.b16 %v31
  %v183 = vunpack.c.l.b16 %v32
  %v184 = vunpack.c.l.b16 %v33
  %v185 = vunpack.c.l.b16 %v34
  %v186 = vunpack.c.l.b16 %v35
  %v187 = vunpack.c.l.b16 %v36
  %v188 = vunpack.c.l.b16 %v37
  %v189 = vunpack.c.l.b16 %v38
  %v190 = vunpack.c.l.b16 %v39
  %v191 = vunpack.c.l.b16 %v40
  %v192 = vunpack.c.l.b16 %v41
  %v193 = vunpack.c.l.b16 %v42
  %v194 = vunpack.c.l.b16 %v43
  %v195 = vunpack.c.l.b16 %v44
  %v196 = vunpack.c.l.b16 %v45
  %v197 = vunpack.c.l.b16 %v46
  %v198 = vunpack.c.l.b16 %v47
  %v199 = vunpack.c.l.b16 %v48
  %v200 = vunpack.c.l.b16 %v49
  %v201 = vunpack.c.l.b16 %v50
  %v202 = vunpack.c.l.b16 %v51
  %v203 = vunpack.c.l.b16 %v52
  %v204 = vunpack.c.l.b16 %v53
  %v205 = vunpack.c.l.b16 %v54
  %v206 = vunpack.c.l.b16 %v55
  %v207 = vunpack.c.l.b16 %v56
  %v208 = vunpack.c.l.b16 %v57
  %v209 = vunpack.c.l.b16 %v58
  %v210 = vunpack.c.l.b16 %v59
  %v211 = vunpack.c.l.b16 %v60
  %v212 = vunpack.c.l.b16 %v61
  %v213 = vunpack.c.l.b16 %v62
  %v214 = vunpack.c.l.b16 %v63
  %v215 = vunpack.c.l.b16 %v64
  %v216 = vunpack.c.l.b16 %v65
  %v217 = vunpack.c.l.b16 %v66
  %v218 = vunpack.c.l.b16 %v67
  %v219 = vunpack.c.l.b16 %v68
  %v220 = vunpack.c.l.b16 %v69
  %v221 = vunpack.c.l.b16 %v70
  %v222 = vunpack.c.l.b16 %v71
  %v223 = vunpack.c.l.b16 %v72
  %v224 = vunpack.c.l.b16 %v73
  %v225 = vunpack.c.l.b16 %v74
  %v226 = vunpack.c.l.b16 %v75
  %v227 = vunpack.c.l.b16 %v76
  %v228 = vunpack.c.l.b16 %v77
  %v229 = vunpack.c.l.b16 %v78
  %v230 = vpack.c.b16 %v167, %v166
  %v231 = vpack.c.b16 %v169, %v168
  %v232 = vpack.c.b16 %v171, %v170
  %v233 = vpack.c.b16 %v173, %v172
  %v234 = vpack.c.b16 %v175, %v174
  %v235 = vpack.c.b16 %v177, %v176
  %v236 = vpack.c.b16 %v179, %v178
  %v237 = vpack.c.b16 %v181, %v180
  %v238 = vpack.c.b16 %v183, %v182
  %v239 = vpack.c.b16 %v185, %v184
  %v240 = vpack.c.b16 %v187, %v186
  %v241 = vpack.c.b16 %v189, %v188
  %v242 = vpack.c.b16 %v191, %v190
  %v243 = vpack.c.b16 %v193, %v192
  %v244 = vpack.c.b16 %v195, %v194
  %v245 = vpack.c.b16 %v197, %v196
  %v246 = vpack.c.b16 %v199, %v198
  %v247 = vpack.c.b16 %v201, %v200
  %v248 = vpack.c.b16 %v203, %v202
  %v249 = vpack.c.b16 %v205, %v204
  %v250 = vpack.c.b16 %v207, %v206
  %v251 = vpack.c.b16 %v209, %v208
  %v252 = vpack.c.b16 %v211, %v210
  %v253 = vpack.c.b16 %v213, %v212
  %v254 = vpack.c.b16 %v215, %v214
  %v255 = vpack.c.b16 %v217, %v216
  %v256 = vpack.c.b16 %v219, %v218
  %v257 = vpack.c.b16 %v221, %v220
  %v258 = vpack.c.b16 %v223, %v222
  %v259 = vpack.c.b16 %v225, %v224
  %v260 = vpack.c.b16 %v227, %v226
  %v261 = vpack.c.b16 %v229, %v228
  %v310 = vunpack.c.l.b16 %v79
  %v311 = vunpack.c.l.b16 %v80
  %v312 = vunpack.c.l.b16 %v81
  %v313 = vunpack.c.l.b16 %v82
  %v314 = vunpack.c.l.b16 %v83
  %v315 = vunpack.c.l.b16 %v84
  %v316 = vunpack.c.l.b16 %v85
  %v317 = vunpack.c.l.b16 %v86
  %v318 = vunpack.c.l.b16 %v87
  %v319 = vunpack.c.l.b16 %v88
  %v320 = vunpack.c.l.b16 %v89
  %v321 = vunpack.c.l.b16 %v90
  %v322 = vunpack.c.l.b16 %v91
  %v323 = vunpack.c.l.b16 %v92
  %v324 = vunpack.c.l.b16 %v93
  %v325 = vunpack.c.l.b16 %v94
  %v326 = vpack.c.b16 %v311, %v310
  %v327 = vpack.c.b16 %v313, %v312
  %v328 = vpack.c.b16 %v315, %v314
  %v329 = vpack.c.b16 %v317, %v316
  %v330 = vpack.c.b16 %v319, %v318
  %v331 = vpack.c.b16 %v321, %v320
  %v332 = vpack.c.b16 %v323, %v322
  %v333 = vpack.c.b16 %v325, %v324
  %342 = vmatprep.subr.bf16.mxu0 0
  %343 = vmatpush1.bf16.msra.mxu0 %v326
  %344 = vmatprep.subr.bf16.mxu0 0
  %345 = vmatpush1.bf16.msra.mxu0 %v327
  %346 = vmatprep.subr.bf16.mxu0 0
  %347 = vmatpush1.bf16.msra.mxu0 %v328
  %348 = vmatprep.subr.bf16.mxu0 0
  %349 = vmatpush1.bf16.msra.mxu0 %v329
  %350 = vmatprep.subr.bf16.mxu0 0
  %351 = vmatpush1.bf16.msra.mxu0 %v330
  %352 = vmatprep.subr.bf16.mxu0 0
  %353 = vmatpush1.bf16.msra.mxu0 %v331
  %354 = vmatprep.subr.bf16.mxu0 0
  %355 = vmatpush1.bf16.msra.mxu0 %v332
  %356 = vmatprep.subr.bf16.mxu0 0
  %357 = vmatpush1.bf16.msra.mxu0 %v333
  %358 = vmatprep.subr.bf16.mxu0 0
  %359 = vmatpush1.bf16.msra.mxu0 0
  %360 = vmatprep.subr.bf16.mxu0 0
  %361 = vmatpush1.bf16.msra.mxu0 0
  %362 = vmatprep.subr.bf16.mxu0 0
  %363 = vmatpush1.bf16.msra.mxu0 0
  %364 = vmatprep.subr.bf16.mxu0 0
  %365 = vmatpush1.bf16.msra.mxu0 0
  %366 = vmatprep.subr.bf16.mxu0 0
  %367 = vmatpush1.bf16.msra.mxu0 0
  %368 = vmatprep.subr.bf16.mxu0 0
  %369 = vmatpush1.bf16.msra.mxu0 0
  %370 = vmatprep.subr.bf16.mxu0 0
  %371 = vmatpush1.bf16.msra.mxu0 0
  %372 = vmatprep.subr.bf16.mxu0 0
  %373 = vmatpush1.bf16.msra.mxu0 0
  %374 = vmatprep.mubr.bf16.mxu0 0
  %375 = vmatmul.mubr.bf16.gmra.mrb[0].mxu0 %v230
  %v376 = vpop.f32.mrb[0].mxu0
  %v377 = vadd.f32 %v100, %v376
  %v378 = vpop.f32.mrb[0].mxu0
  %v379 = vpop.f32.mrb[0].mxu0
  %v380 = vadd.f32 %v100, %v379
  %v381 = vpop.f32.mrb[0].mxu0
  %382 = vmatprep.mubr.bf16.mxu0 0
  %383 = vmatmul.mubr.bf16.gmra.mrb[0].mxu0 %v231
  %v384 = vpop.f32.mrb[0].mxu0
  %v385 = vadd.f32 %v100, %v384
  %v386 = vpop.f32.mrb[0].mxu0
  %v387 = vpop.f32.mrb[0].mxu0
  %v388 = vadd.f32 %v100, %v387
  %v389 = vpop.f32.mrb[0].mxu0
  %390 = vmatprep.mubr.bf16.mxu0 0
  %391 = vmatmul.mubr.bf16.gmra.mrb[0].mxu0 %v232
  %v392 = vpop.f32.mrb[0].mxu0
  %v393 = vadd.f32 %v100, %v392
  %v394 = vpop.f32.mrb[0].mxu0
  %v395 = vpop.f32.mrb[0].mxu0
  %v396 = vadd.f32 %v100, %v395
  %v397 = vpop.f32.mrb[0].mxu0
  %398 = vmatprep.mubr.bf16.mxu0 0
  %399 = vmatmul.mubr.bf16.gmra.mrb[0].mxu0 %v233
  %v400 = vpop.f32.mrb[0].mxu0
  %v401 = vadd.f32 %v100, %v400
  %v402 = vpop.f32.mrb[0].mxu0
  %v403 = vpop.f32.mrb[0].mxu0
  %v404 = vadd.f32 %v100, %v403
  %v405 = vpop.f32.mrb[0].mxu0
  %406 = vmatprep.mubr.bf16.mxu0 0
  %407 = vmatmul.mubr.bf16.gmra.mrb[0].mxu0 %v234
  %v408 = vpop.f32.mrb[0].mxu0
  %v409 = vadd.f32 %v100, %v408
  %v410 = vpop.f32.mrb[0].mxu0
  %v411 = vpop.f32.mrb[0].mxu0
  %v412 = vadd.f32 %v100, %v411
  %v413 = vpop.f32.mrb[0].mxu0
  %414 = vmatprep.mubr.bf16.mxu0 0
  %415 = vmatmul.mubr.bf16.gmra.mrb[0].mxu0 %v235
  %v416 = vpop.f32.mrb[0].mxu0
  %v417 = vadd.f32 %v100, %v416
  %v418 = vpop.f32.mrb[0].mxu0
  %v419 = vpop.f32.mrb[0].mxu0
  %v420 = vadd.f32 %v100, %v419
  %v421 = vpop.f32.mrb[0].mxu0
  %422 = vmatprep.mubr.bf16.mxu0 0
  %423 = vmatmul.mubr.bf16.gmra.mrb[0].mxu0 %v236
  %v424 = vpop.f32.mrb[0].mxu0
  %v425 = vadd.f32 %v100, %v424
  %v426 = vpop.f32.mrb[0].mxu0
  %v427 = vpop.f32.mrb[0].mxu0
  %v428 = vadd.f32 %v100, %v427
  %v429 = vpop.f32.mrb[0].mxu0
  %430 = vmatprep.mubr.bf16.mxu0 0
  %431 = vmatmul.mubr.bf16.gmra.mrb[0].mxu0 %v237
  %v432 = vpop.f32.mrb[0].mxu0
  %v433 = vadd.f32 %v100, %v432
  %v434 = vpop.f32.mrb[0].mxu0
  %v435 = vpop.f32.mrb[0].mxu0
  %v436 = vadd.f32 %v100, %v435
  %v437 = vpop.f32.mrb[0].mxu0
  %438 = vmatprep.mubr.bf16.mxu0 0
  %439 = vmatmul.mubr.bf16.gmra.mrb[0].mxu0 %v238
  %v440 = vpop.f32.mrb[0].mxu0
  %v441 = vadd.f32 %v100, %v440
  %v442 = vpop.f32.mrb[0].mxu0
  %v443 = vpop.f32.mrb[0].mxu0
  %v444 = vadd.f32 %v100, %v443
  %v445 = vpop.f32.mrb[0].mxu0
  %446 = vmatprep.mubr.bf16.mxu0 0
  %447 = vmatmul.mubr.bf16.gmra.mrb[0].mxu0 %v239
  %v448 = vpop.f32.mrb[0].mxu0
  %v449 = vadd.f32 %v100, %v448
  %v450 = vpop.f32.mrb[0].mxu0
  %v451 = vpop.f32.mrb[0].mxu0
  %v452 = vadd.f32 %v100, %v451
  %v453 = vpop.f32.mrb[0].mxu0
  %454 = vmatprep.mubr.bf16.mxu0 0
  %455 = vmatmul.mubr.bf16.gmra.mrb[0].mxu0 %v240
  %v456 = vpop.f32.mrb[0].mxu0
  %v457 = vadd.f32 %v100, %v456
  %v458 = vpop.f32.mrb[0].mxu0
  %v459 = vpop.f32.mrb[0].mxu0
  %v460 = vadd.f32 %v100, %v459
  %v461 = vpop.f32.mrb[0].mxu0
  %462 = vmatprep.mubr.bf16.mxu0 0
  %463 = vmatmul.mubr.bf16.gmra.mrb[0].mxu0 %v241
  %v464 = vpop.f32.mrb[0].mxu0
  %v465 = vadd.f32 %v100, %v464
  %v466 = vpop.f32.mrb[0].mxu0
  %v467 = vpop.f32.mrb[0].mxu0
  %v468 = vadd.f32 %v100, %v467
  %v469 = vpop.f32.mrb[0].mxu0
  %470 = vmatprep.mubr.bf16.mxu0 0
  %471 = vmatmul.mubr.bf16.gmra.mrb[0].mxu0 %v242
  %v472 = vpop.f32.mrb[0].mxu0
  %v473 = vadd.f32 %v100, %v472
  %v474 = vpop.f32.mrb[0].mxu0
  %v475 = vpop.f32.mrb[0].mxu0
  %v476 = vadd.f32 %v100, %v475
  %v477 = vpop.f32.mrb[0].mxu0
  %478 = vmatprep.mubr.bf16.mxu0 0
  %479 = vmatmul.mubr.bf16.gmra.mrb[0].mxu0 %v243
  %v480 = vpop.f32.mrb[0].mxu0
  %v481 = vadd.f32 %v100, %v480
  %v482 = vpop.f32.mrb[0].mxu0
  %v483 = vpop.f32.mrb[0].mxu0
  %v484 = vadd.f32 %v100, %v483
  %v485 = vpop.f32.mrb[0].mxu0
  %486 = vmatprep.mubr.bf16.mxu0 0
  %487 = vmatmul.mubr.bf16.gmra.mrb[0].mxu0 %v244
  %v488 = vpop.f32.mrb[0].mxu0
  %v489 = vadd.f32 %v100, %v488
  %v490 = vpop.f32.mrb[0].mxu0
  %v491 = vpop.f32.mrb[0].mxu0
  %v492 = vadd.f32 %v100, %v491
  %v493 = vpop.f32.mrb[0].mxu0
  %494 = vmatprep.mubr.bf16.mxu0 0
  %495 = vmatmul.mubr.bf16.gmra.mrb[0].mxu0 %v245
  %v496 = vpop.f32.mrb[0].mxu0
  %v497 = vadd.f32 %v100, %v496
  %v498 = vpop.f32.mrb[0].mxu0
  %v499 = vpop.f32.mrb[0].mxu0
  %v500 = vadd.f32 %v100, %v499
  %v501 = vpop.f32.mrb[0].mxu0
  %502 = vmatprep.mubr.bf16.mxu0 0
  %503 = vmatmul.mubr.bf16.gmra.mrb[0].mxu0 %v246
  %v504 = vpop.f32.mrb[0].mxu0
  %v505 = vadd.f32 %v100, %v504
  %v506 = vpop.f32.mrb[0].mxu0
  %v507 = vpop.f32.mrb[0].mxu0
  %v508 = vadd.f32 %v100, %v507
  %v509 = vpop.f32.mrb[0].mxu0
  %510 = vmatprep.mubr.bf16.mxu0 0
  %511 = vmatmul.mubr.bf16.gmra.mrb[0].mxu0 %v247
  %v512 = vpop.f32.mrb[0].mxu0
  %v513 = vadd.f32 %v100, %v512
  %v514 = vpop.f32.mrb[0].mxu0
  %v515 = vpop.f32.mrb[0].mxu0
  %v516 = vadd.f32 %v100, %v515
  %v517 = vpop.f32.mrb[0].mxu0
  %518 = vmatprep.mubr.bf16.mxu0 0
  %519 = vmatmul.mubr.bf16.gmra.mrb[0].mxu0 %v248
  %v520 = vpop.f32.mrb[0].mxu0
  %v521 = vadd.f32 %v100, %v520
  %v522 = vpop.f32.mrb[0].mxu0
  %v523 = vpop.f32.mrb[0].mxu0
  %v524 = vadd.f32 %v100, %v523
  %v525 = vpop.f32.mrb[0].mxu0
  %526 = vmatprep.mubr.bf16.mxu0 0
  %527 = vmatmul.mubr.bf16.gmra.mrb[0].mxu0 %v249
  %v528 = vpop.f32.mrb[0].mxu0
  %v529 = vadd.f32 %v100, %v528
  %v530 = vpop.f32.mrb[0].mxu0
  %v531 = vpop.f32.mrb[0].mxu0
  %v532 = vadd.f32 %v100, %v531
  %v533 = vpop.f32.mrb[0].mxu0
  %534 = vmatprep.mubr.bf16.mxu0 0
  %535 = vmatmul.mubr.bf16.gmra.mrb[0].mxu0 %v250
  %v536 = vpop.f32.mrb[0].mxu0
  %v537 = vadd.f32 %v100, %v536
  %v538 = vpop.f32.mrb[0].mxu0
  %v539 = vpop.f32.mrb[0].mxu0
  %v540 = vadd.f32 %v100, %v539
  %v541 = vpop.f32.mrb[0].mxu0
  %542 = vmatprep.mubr.bf16.mxu0 0
  %543 = vmatmul.mubr.bf16.gmra.mrb[0].mxu0 %v251
  %v544 = vpop.f32.mrb[0].mxu0
  %v545 = vadd.f32 %v100, %v544
  %v546 = vpop.f32.mrb[0].mxu0
  %v547 = vpop.f32.mrb[0].mxu0
  %v548 = vadd.f32 %v100, %v547
  %v549 = vpop.f32.mrb[0].mxu0
  %550 = vmatprep.mubr.bf16.mxu0 0
  %551 = vmatmul.mubr.bf16.gmra.mrb[0].mxu0 %v252
  %v552 = vpop.f32.mrb[0].mxu0
  %v553 = vadd.f32 %v100, %v552
  %v554 = vpop.f32.mrb[0].mxu0
  %v555 = vpop.f32.mrb[0].mxu0
  %v556 = vadd.f32 %v100, %v555
  %v557 = vpop.f32.mrb[0].mxu0
  %558 = vmatprep.mubr.bf16.mxu0 0
  %559 = vmatmul.mubr.bf16.gmra.mrb[0].mxu0 %v253
  %v560 = vpop.f32.mrb[0].mxu0
  %v561 = vadd.f32 %v100, %v560
  %v562 = vpop.f32.mrb[0].mxu0
  %v563 = vpop.f32.mrb[0].mxu0
  %v564 = vadd.f32 %v100, %v563
  %v565 = vpop.f32.mrb[0].mxu0
  %566 = vmatprep.mubr.bf16.mxu0 0
  %567 = vmatmul.mubr.bf16.gmra.mrb[0].mxu0 %v254
  %v568 = vpop.f32.mrb[0].mxu0
  %v569 = vadd.f32 %v100, %v568
  %v570 = vpop.f32.mrb[0].mxu0
  %v571 = vpop.f32.mrb[0].mxu0
  %v572 = vadd.f32 %v100, %v571
  %v573 = vpop.f32.mrb[0].mxu0
  %574 = vmatprep.mubr.bf16.mxu0 0
  %575 = vmatmul.mubr.bf16.gmra.mrb[0].mxu0 %v255
  %v576 = vpop.f32.mrb[0].mxu0
  %v577 = vadd.f32 %v100, %v576
  %v578 = vpop.f32.mrb[0].mxu0
  %v579 = vpop.f32.mrb[0].mxu0
  %v580 = vadd.f32 %v100, %v579
  %v581 = vpop.f32.mrb[0].mxu0
  %582 = vmatprep.mubr.bf16.mxu0 0
  %583 = vmatmul.mubr.bf16.gmra.mrb[0].mxu0 %v256
  %v584 = vpop.f32.mrb[0].mxu0
  %v585 = vadd.f32 %v100, %v584
  %v586 = vpop.f32.mrb[0].mxu0
  %v587 = vpop.f32.mrb[0].mxu0
  %v588 = vadd.f32 %v100, %v587
  %v589 = vpop.f32.mrb[0].mxu0
  %590 = vmatprep.mubr.bf16.mxu0 0
  %591 = vmatmul.mubr.bf16.gmra.mrb[0].mxu0 %v257
  %v592 = vpop.f32.mrb[0].mxu0
  %v593 = vadd.f32 %v100, %v592
  %v594 = vpop.f32.mrb[0].mxu0
  %v595 = vpop.f32.mrb[0].mxu0
  %v596 = vadd.f32 %v100, %v595
  %v597 = vpop.f32.mrb[0].mxu0
  %598 = vmatprep.mubr.bf16.mxu0 0
  %599 = vmatmul.mubr.bf16.gmra.mrb[0].mxu0 %v258
  %v600 = vpop.f32.mrb[0].mxu0
  %v601 = vadd.f32 %v100, %v600
  %v602 = vpop.f32.mrb[0].mxu0
  %v603 = vpop.f32.mrb[0].mxu0
  %v604 = vadd.f32 %v100, %v603
  %v605 = vpop.f32.mrb[0].mxu0
  %606 = vmatprep.mubr.bf16.mxu0 0
  %607 = vmatmul.mubr.bf16.gmra.mrb[0].mxu0 %v259
  %v608 = vpop.f32.mrb[0].mxu0
  %v609 = vadd.f32 %v100, %v608
  %v610 = vpop.f32.mrb[0].mxu0
  %v611 = vpop.f32.mrb[0].mxu0
  %v612 = vadd.f32 %v100, %v611
  %v613 = vpop.f32.mrb[0].mxu0
  %614 = vmatprep.mubr.bf16.mxu0 0
  %615 = vmatmul.mubr.bf16.gmra.mrb[0].mxu0 %v260
  %v616 = vpop.f32.mrb[0].mxu0
  %v617 = vadd.f32 %v100, %v616
  %v618 = vpop.f32.mrb[0].mxu0
  %v619 = vpop.f32.mrb[0].mxu0
  %v620 = vadd.f32 %v100, %v619
  %v621 = vpop.f32.mrb[0].mxu0
  %622 = vmatprep.mubr.bf16.mxu0 0
  %623 = vmatmul.mubr.bf16.gmra.mrb[0].mxu0 %v261
  %v624 = vpop.f32.mrb[0].mxu0
  %v625 = vadd.f32 %v100, %v624
  %v626 = vpop.f32.mrb[0].mxu0
  %v627 = vpop.f32.mrb[0].mxu0
  %v628 = vadd.f32 %v100, %v627
  %v629 = vpop.f32.mrb[0].mxu0
  %630 = vdwg.mxu0
  %v631 = vpack.c.bf16 %v380, %v377
  %v632 = vpack.c.bf16 %v388, %v385
  %v633 = vpack.c.bf16 %v396, %v393
  %v634 = vpack.c.bf16 %v404, %v401
  %v635 = vpack.c.bf16 %v412, %v409
  %v636 = vpack.c.bf16 %v420, %v417
  %v637 = vpack.c.bf16 %v428, %v425
  %v638 = vpack.c.bf16 %v436, %v433
  %v639 = vpack.c.bf16 %v444, %v441
  %v640 = vpack.c.bf16 %v452, %v449
  %v641 = vpack.c.bf16 %v460, %v457
  %v642 = vpack.c.bf16 %v468, %v465
  %v643 = vpack.c.bf16 %v476, %v473
  %v644 = vpack.c.bf16 %v484, %v481
  %v645 = vpack.c.bf16 %v492, %v489
  %v646 = vpack.c.bf16 %v500, %v497
  %v647 = vpack.c.bf16 %v508, %v505
  %v648 = vpack.c.bf16 %v516, %v513
  %v649 = vpack.c.bf16 %v524, %v521
  %v650 = vpack.c.bf16 %v532, %v529
  %v651 = vpack.c.bf16 %v540, %v537
  %v652 = vpack.c.bf16 %v548, %v545
  %v653 = vpack.c.bf16 %v556, %v553
  %v654 = vpack.c.bf16 %v564, %v561
  %v655 = vpack.c.bf16 %v572, %v569
  %v656 = vpack.c.bf16 %v580, %v577
  %v657 = vpack.c.bf16 %v588, %v585
  %v658 = vpack.c.bf16 %v596, %v593
  %v659 = vpack.c.bf16 %v604, %v601
  %v660 = vpack.c.bf16 %v612, %v609
  %v661 = vpack.c.bf16 %v620, %v617
  %v662 = vpack.c.bf16 %v628, %v625
  %v695 = vunpack.c.l.b16 %v631
  %v696 = vunpack.c.h.b16 %v631
  %v697 = vunpack.c.l.b16 %v632
  %v698 = vunpack.c.h.b16 %v632
  %v699 = vunpack.c.l.b16 %v633
  %v700 = vunpack.c.h.b16 %v633
  %v701 = vunpack.c.l.b16 %v634
  %v702 = vunpack.c.h.b16 %v634
  %v703 = vunpack.c.l.b16 %v635
  %v704 = vunpack.c.h.b16 %v635
  %v705 = vunpack.c.l.b16 %v636
  %v706 = vunpack.c.h.b16 %v636
  %v707 = vunpack.c.l.b16 %v637
  %v708 = vunpack.c.h.b16 %v637
  %v709 = vunpack.c.l.b16 %v638
  %v710 = vunpack.c.h.b16 %v638
  %v711 = vunpack.c.l.b16 %v639
  %v712 = vunpack.c.h.b16 %v639
  %v713 = vunpack.c.l.b16 %v640
  %v714 = vunpack.c.h.b16 %v640
  %v715 = vunpack.c.l.b16 %v641
  %v716 = vunpack.c.h.b16 %v641
  %v717 = vunpack.c.l.b16 %v642
  %v718 = vunpack.c.h.b16 %v642
  %v719 = vunpack.c.l.b16 %v643
  %v720 = vunpack.c.h.b16 %v643
  %v721 = vunpack.c.l.b16 %v644
  %v722 = vunpack.c.h.b16 %v644
  %v723 = vunpack.c.l.b16 %v645
  %v724 = vunpack.c.h.b16 %v645
  %v725 = vunpack.c.l.b16 %v646
  %v726 = vunpack.c.h.b16 %v646
  %v727 = vunpack.c.l.b16 %v647
  %v728 = vunpack.c.h.b16 %v647
  %v729 = vunpack.c.l.b16 %v648
  %v730 = vunpack.c.h.b16 %v648
  %v731 = vunpack.c.l.b16 %v649
  %v732 = vunpack.c.h.b16 %v649
  %v733 = vunpack.c.l.b16 %v650
  %v734 = vunpack.c.h.b16 %v650
  %v735 = vunpack.c.l.b16 %v651
  %v736 = vunpack.c.h.b16 %v651
  %v737 = vunpack.c.l.b16 %v652
  %v738 = vunpack.c.h.b16 %v652
  %v739 = vunpack.c.l.b16 %v653
  %v740 = vunpack.c.h.b16 %v653
  %v741 = vunpack.c.l.b16 %v654
  %v742 = vunpack.c.h.b16 %v654
  %v743 = vunpack.c.l.b16 %v655
  %v744 = vunpack.c.h.b16 %v655
  %v745 = vunpack.c.l.b16 %v656
  %v746 = vunpack.c.h.b16 %v656
  %v747 = vunpack.c.l.b16 %v657
  %v748 = vunpack.c.h.b16 %v657
  %v749 = vunpack.c.l.b16 %v658
  %v750 = vunpack.c.h.b16 %v658
  %v751 = vunpack.c.l.b16 %v659
  %v752 = vunpack.c.h.b16 %v659
  %v753 = vunpack.c.l.b16 %v660
  %v754 = vunpack.c.h.b16 %v660
  %v755 = vunpack.c.l.b16 %v661
  %v756 = vunpack.c.h.b16 %v661
  %v757 = vunpack.c.l.b16 %v662
  %v758 = vunpack.c.h.b16 %v662
  %v759 = vpack.c.b16 %v695, %v695
  %v760 = vpack.c.b16 %v696, %v696
  %v761 = vpack.c.b16 %v697, %v697
  %v762 = vpack.c.b16 %v698, %v698
  %v763 = vpack.c.b16 %v699, %v699
  %v764 = vpack.c.b16 %v700, %v700
  %v765 = vpack.c.b16 %v701, %v701
  %v766 = vpack.c.b16 %v702, %v702
  %v767 = vpack.c.b16 %v703, %v703
  %v768 = vpack.c.b16 %v704, %v704
  %v769 = vpack.c.b16 %v705, %v705
  %v770 = vpack.c.b16 %v706, %v706
  %v771 = vpack.c.b16 %v707, %v707
  %v772 = vpack.c.b16 %v708, %v708
  %v773 = vpack.c.b16 %v709, %v709
  %v774 = vpack.c.b16 %v710, %v710
  %v775 = vpack.c.b16 %v711, %v711
  %v776 = vpack.c.b16 %v712, %v712
  %v777 = vpack.c.b16 %v713, %v713
  %v778 = vpack.c.b16 %v714, %v714
  %v779 = vpack.c.b16 %v715, %v715
  %v780 = vpack.c.b16 %v716, %v716
  %v781 = vpack.c.b16 %v717, %v717
  %v782 = vpack.c.b16 %v718, %v718
  %v783 = vpack.c.b16 %v719, %v719
  %v784 = vpack.c.b16 %v720, %v720
  %v785 = vpack.c.b16 %v721, %v721
  %v786 = vpack.c.b16 %v722, %v722
  %v787 = vpack.c.b16 %v723, %v723
  %v788 = vpack.c.b16 %v724, %v724
  %v789 = vpack.c.b16 %v725, %v725
  %v790 = vpack.c.b16 %v726, %v726
  %v791 = vpack.c.b16 %v727, %v727
  %v792 = vpack.c.b16 %v728, %v728
  %v793 = vpack.c.b16 %v729, %v729
  %v794 = vpack.c.b16 %v730, %v730
  %v795 = vpack.c.b16 %v731, %v731
  %v796 = vpack.c.b16 %v732, %v732
  %v797 = vpack.c.b16 %v733, %v733
  %v798 = vpack.c.b16 %v734, %v734
  %v799 = vpack.c.b16 %v735, %v735
  %v800 = vpack.c.b16 %v736, %v736
  %v801 = vpack.c.b16 %v737, %v737
  %v802 = vpack.c.b16 %v738, %v738
  %v803 = vpack.c.b16 %v739, %v739
  %v804 = vpack.c.b16 %v740, %v740
  %v805 = vpack.c.b16 %v741, %v741
  %v806 = vpack.c.b16 %v742, %v742
  %v807 = vpack.c.b16 %v743, %v743
  %v808 = vpack.c.b16 %v744, %v744
  %v809 = vpack.c.b16 %v745, %v745
  %v810 = vpack.c.b16 %v746, %v746
  %v811 = vpack.c.b16 %v747, %v747
  %v812 = vpack.c.b16 %v748, %v748
  %v813 = vpack.c.b16 %v749, %v749
  %v814 = vpack.c.b16 %v750, %v750
  %v815 = vpack.c.b16 %v751, %v751
  %v816 = vpack.c.b16 %v752, %v752
  %v817 = vpack.c.b16 %v753, %v753
  %v818 = vpack.c.b16 %v754, %v754
  %v819 = vpack.c.b16 %v755, %v755
  %v820 = vpack.c.b16 %v756, %v756
  %v821 = vpack.c.b16 %v757, %v757
  %v822 = vpack.c.b16 %v758, %v758
  %887 = vst [vmem:[%s3] sm:$0xf] %v759
  %888 = vst [vmem:[%s3 + $0x4] sm:$0xf] %v760
  %889 = vst [vmem:[%s3 + $0x8] sm:$0xf] %v761
  %890 = vst [vmem:[%s3 + $0xc] sm:$0xf] %v762
  %891 = vst [vmem:[%s3 + $0x10] sm:$0xf] %v763
  %892 = vst [vmem:[%s3 + $0x14] sm:$0xf] %v764
  %893 = vst [vmem:[%s3 + $0x18] sm:$0xf] %v765
  %894 = vst [vmem:[%s3 + $0x1c] sm:$0xf] %v766
  %895 = vst [vmem:[%s3 + $0x20] sm:$0xf] %v767
  %896 = vst [vmem:[%s3 + $0x24] sm:$0xf] %v768
  %897 = vst [vmem:[%s3 + $0x28] sm:$0xf] %v769
  %898 = vst [vmem:[%s3 + $0x2c] sm:$0xf] %v770
  %899 = vst [vmem:[%s3 + $0x30] sm:$0xf] %v771
  %900 = vst [vmem:[%s3 + $0x34] sm:$0xf] %v772
  %901 = vst [vmem:[%s3 + $0x38] sm:$0xf] %v773
  %902 = vst [vmem:[%s3 + $0x3c] sm:$0xf] %v774
  %903 = vst [vmem:[%s3 + $0x40] sm:$0xf] %v775
  %904 = vst [vmem:[%s3 + $0x44] sm:$0xf] %v776
  %905 = vst [vmem:[%s3 + $0x48] sm:$0xf] %v777
  %906 = vst [vmem:[%s3 + $0x4c] sm:$0xf] %v778
  %907 = vst [vmem:[%s3 + $0x50] sm:$0xf] %v779
  %908 = vst [vmem:[%s3 + $0x54] sm:$0xf] %v780
  %909 = vst [vmem:[%s3 + $0x58] sm:$0xf] %v781
  %910 = vst [vmem:[%s3 + $0x5c] sm:$0xf] %v782
  %911 = vst [vmem:[%s3 + $0x60] sm:$0xf] %v783
  %912 = vst [vmem:[%s3 + $0x64] sm:$0xf] %v784
  %913 = vst [vmem:[%s3 + $0x68] sm:$0xf] %v785
  %914 = vst [vmem:[%s3 + $0x6c] sm:$0xf] %v786
  %915 = vst [vmem:[%s3 + $0x70] sm:$0xf] %v787
  %916 = vst [vmem:[%s3 + $0x74] sm:$0xf] %v788
  %917 = vst [vmem:[%s3 + $0x78] sm:$0xf] %v789
  %918 = vst [vmem:[%s3 + $0x7c] sm:$0xf] %v790
  %919 = vst [vmem:[%s3 + $0x80] sm:$0xf] %v791
  %920 = vst [vmem:[%s3 + $0x84] sm:$0xf] %v792
  %921 = vst [vmem:[%s3 + $0x88] sm:$0xf] %v793
  %922 = vst [vmem:[%s3 + $0x8c] sm:$0xf] %v794
  %923 = vst [vmem:[%s3 + $0x90] sm:$0xf] %v795
  %924 = vst [vmem:[%s3 + $0x94] sm:$0xf] %v796
  %925 = vst [vmem:[%s3 + $0x98] sm:$0xf] %v797
  %926 = vst [vmem:[%s3 + $0x9c] sm:$0xf] %v798
  %927 = vst [vmem:[%s3 + $0xa0] sm:$0xf] %v799
  %928 = vst [vmem:[%s3 + $0xa4] sm:$0xf] %v800
  %929 = vst [vmem:[%s3 + $0xa8] sm:$0xf] %v801
  %930 = vst [vmem:[%s3 + $0xac] sm:$0xf] %v802
  %931 = vst [vmem:[%s3 + $0xb0] sm:$0xf] %v803
  %932 = vst [vmem:[%s3 + $0xb4] sm:$0xf] %v804
  %933 = vst [vmem:[%s3 + $0xb8] sm:$0xf] %v805
  %934 = vst [vmem:[%s3 + $0xbc] sm:$0xf] %v806
  %935 = vst [vmem:[%s3 + $0xc0] sm:$0xf] %v807
  %936 = vst [vmem:[%s3 + $0xc4] sm:$0xf] %v808
  %937 = vst [vmem:[%s3 + $0xc8] sm:$0xf] %v809
  %938 = vst [vmem:[%s3 + $0xcc] sm:$0xf] %v810
  %939 = vst [vmem:[%s3 + $0xd0] sm:$0xf] %v811
  %940 = vst [vmem:[%s3 + $0xd4] sm:$0xf] %v812
  %941 = vst [vmem:[%s3 + $0xd8] sm:$0xf] %v813
  %942 = vst [vmem:[%s3 + $0xdc] sm:$0xf] %v814
  %943 = vst [vmem:[%s3 + $0xe0] sm:$0xf] %v815
  %944 = vst [vmem:[%s3 + $0xe4] sm:$0xf] %v816
  %945 = vst [vmem:[%s3 + $0xe8] sm:$0xf] %v817
  %946 = vst [vmem:[%s3 + $0xec] sm:$0xf] %v818
  %947 = vst [vmem:[%s3 + $0xf0] sm:$0xf] %v819
  %948 = vst [vmem:[%s3 + $0xf4] sm:$0xf] %v820
  %949 = vst [vmem:[%s3 + $0xf8] sm:$0xf] %v821
  %950 = vst [vmem:[%s3 + $0xfc] sm:$0xf] %v822
  // Predicated region
  $region14: #{custom_conv2d_forward.1} parent=0 // pred_check
    _
  $region15: #{custom_conv2d_forward.1} parent=0 // pred_check_branch
    %952 = sbr.rel (0) target = $region17
  $region16: #{custom_conv2d_forward.1} parent=0 // pred_region
    _
  $region17: #{custom_conv2d_forward.1} parent=0 // pred_fallthru
    _
  // Predicated region
  $region18: #{custom_conv2d_forward.1} parent=0 // pred_check
    _
  $region19: #{custom_conv2d_forward.1} parent=0 // pred_check_branch
    %954 = sbr.rel (0) target = $region21
  $region20: #{custom_conv2d_forward.1} parent=0 // pred_region
    _
  $region21: #{custom_conv2d_forward.1} parent=0 // pred_fallthru
    _

</llo_original>
